<compile_context>
chip_gen: v7x
topology: tpu7x:2x2x1
jax: 0.10.0
libtpu: 0.0.40
codegen_flags: <defaults>
</compile_context>

<pallas_src>
import jax
import jax.numpy as jnp
from jax.experimental import pallas as pl
from jax.experimental.pallas import tpu as pltpu


def _round_up(n, m):
    return ((n + m - 1) // m) * m


def actor_kernel(x_ref, w1_ref, b1_ref, w2_ref, b2_ref, w3_ref, b3_ref, o_ref):
    # Activations cast to bf16 for the MXU; accumulation stays f32.
    x = x_ref[...].astype(jnp.bfloat16)

    # fc1 + ReLU
    h1 = jnp.dot(x, w1_ref[...], preferred_element_type=jnp.float32) + b1_ref[...]
    h1 = jnp.maximum(h1, 0.0).astype(jnp.bfloat16)

    # hidden1 + ReLU
    h2 = jnp.dot(h1, w2_ref[...], preferred_element_type=jnp.float32) + b2_ref[...]
    h2 = jnp.maximum(h2, 0.0).astype(jnp.bfloat16)

    # fc2 + Tanh
    out = jnp.dot(h2, w3_ref[...], preferred_element_type=jnp.float32) + b3_ref[...]
    o_ref[...] = jnp.tanh(out).astype(o_ref.dtype)


def init_actor_params(key, state_dim, action_dim):
    """PyTorch-style uniform init U(-1/sqrt(fan_in), 1/sqrt(fan_in)), f32, unpadded.

    Weights stored transposed from PyTorch, i.e. [in_features, out_features].
    """
    ks = jax.random.split(key, 6)

    def linear(kw, kb, fan_in, fan_out):
        bound = 1.0 / jnp.sqrt(jnp.float32(fan_in))
        w = jax.random.uniform(kw, (fan_in, fan_out), jnp.float32, -bound, bound)
        b = jax.random.uniform(kb, (1, fan_out), jnp.float32, -bound, bound)
        return w, b

    w1, b1 = linear(ks[0], ks[1], state_dim, 400)
    w2, b2 = linear(ks[2], ks[3], 400, 300)
    w3, b3 = linear(ks[4], ks[5], 300, action_dim)
    return (w1, b1, w2, b2, w3, b3)


def prepare_actor_params(params):
    """One-time host-side padding (zeros) + bf16 cast of weights.

    Zero-padding is exact: padded input features multiply zero weight rows,
    padded hidden units are ReLU(0 + 0) = 0, and padded output columns are
    sliced off by the wrapper.
    """
    w1, b1, w2, b2, w3, b3 = params
    s_pad = _round_up(w1.shape[0], 128)
    h1_pad = _round_up(w1.shape[1], 128)   # 400 -> 512
    h2_pad = _round_up(w2.shape[1], 128)   # 300 -> 384
    a_pad = _round_up(w3.shape[1], 128)    # action_dim -> 128

    def pad2(a, rows, cols):
        return jnp.pad(a, ((0, rows - a.shape[0]), (0, cols - a.shape[1])))

    w1p = pad2(w1, s_pad, h1_pad).astype(jnp.bfloat16)
    b1p = pad2(b1, 1, h1_pad).astype(jnp.float32)
    w2p = pad2(w2, h1_pad, h2_pad).astype(jnp.bfloat16)
    b2p = pad2(b2, 1, h2_pad).astype(jnp.float32)
    w3p = pad2(w3, h2_pad, a_pad).astype(jnp.bfloat16)
    b3p = pad2(b3, 1, a_pad).astype(jnp.float32)
    return (w1p, b1p, w2p, b2p, w3p, b3p)


def actor_forward(x, padded_params, action_dim, *, max_block_rows=512):
    """x: [B, state_dim] f32. Returns [B, action_dim] f32."""
    w1, b1, w2, b2, w3, b3 = padded_params
    B, S = x.shape
    s_pad = w1.shape[0]
    a_pad = w3.shape[1]

    # Batch tile: at least 8 rows (sublane), up to max_block_rows, and pad the
    # batch to a multiple of the tile so the grid divides evenly.
    tb = min(max_block_rows, _round_up(B, 8))
    b_pad = _round_up(B, tb)
    if b_pad != B or s_pad != S:
        x = jnp.pad(x, ((0, b_pad - B), (0, s_pad - S)))

    out = pl.pallas_call(
        actor_kernel,
        out_shape=jax.ShapeDtypeStruct((b_pad, a_pad), jnp.float32),
        grid_spec=pltpu.PrefetchScalarGridSpec(
            num_scalar_prefetch=0,
            grid=(b_pad // tb,),
            in_specs=[
                # activations: tiled over batch, pipelined
                pl.BlockSpec((tb, s_pad), lambda i: (i, 0)),
                # weights / biases: constant block index -> resident in VMEM
                pl.BlockSpec(w1.shape, lambda i: (0, 0)),
                pl.BlockSpec(b1.shape, lambda i: (0, 0)),
                pl.BlockSpec(w2.shape, lambda i: (0, 0)),
                pl.BlockSpec(b2.shape, lambda i: (0, 0)),
                pl.BlockSpec(w3.shape, lambda i: (0, 0)),
                pl.BlockSpec(b3.shape, lambda i: (0, 0)),
            ],
            out_specs=pl.BlockSpec((tb, a_pad), lambda i: (i, 0)),
        ),
        compiler_params=pltpu.CompilerParams(
            dimension_semantics=("parallel",),   # lets v7x's 2 TCs split the batch grid
            vmem_limit_bytes=48 * 1024 * 1024,
        ),
    )(x, w1, b1, w2, b2, w3, b3)

    return out[:B, :action_dim]


def actor_reference(x, params):
    w1, b1, w2, b2, w3, b3 = params
    h1 = jnp.maximum(x @ w1 + b1, 0.0)
    h2 = jnp.maximum(h1 @ w2 + b2, 0.0)
    return jnp.tanh(h2 @ w3 + b3)


if __name__ == "__main__":
    state_dim = 8
    action_dim = 4
    batch = 2

    key = jax.random.PRNGKey(0)
    k_params, k_state = jax.random.split(key)

    params = init_actor_params(k_params, state_dim, action_dim)
    padded_params = prepare_actor_params(params)
    state = jax.random.normal(k_state, (batch, state_dim), jnp.float32)

    out = actor_forward(state, padded_params, action_dim)
    out = jax.block_until_ready(out)

    ref = actor_reference(state, params)
    assert out.shape == (batch, action_dim)
    # bf16 weights -> slightly looser tolerance vs the f32 reference.
    assert jnp.allclose(out, ref, atol=2e-2, rtol=2e-2), (
        f"max abs err {jnp.max(jnp.abs(out - ref))}"
    )

    print("KERNEL_OK")
</pallas_src>

<mosaic_0001>
module attributes {stable_mosaic.version = 11 : i64} {
  func.func @actor_kernel(%arg0: i32, %arg1: memref<8x128xf32, #tpu.memory_space<vmem>>, %arg2: memref<128x512xbf16, #tpu.memory_space<vmem>>, %arg3: memref<1x512xf32, #tpu.memory_space<vmem>>, %arg4: memref<512x384xbf16, #tpu.memory_space<vmem>>, %arg5: memref<1x384xf32, #tpu.memory_space<vmem>>, %arg6: memref<384x128xbf16, #tpu.memory_space<vmem>>, %arg7: memref<1x128xf32, #tpu.memory_space<vmem>>, %arg8: memref<8x128xf32, #tpu.memory_space<vmem>>) attributes {dimension_semantics = [#tpu.dimension_semantics<parallel>], iteration_bounds = array<i64: 1>, scalar_prefetch = 0 : i64, scratch_operands = 0 : i64, tpu.core_type = #tpu.core_type<tc>, window_params = [{transform_indices = @transform_0, window_bounds = array<i64: 8, 128>}, {pipeline_mode = #tpu.pipeline_mode<synchronous>, transform_indices = @transform_1, window_bounds = array<i64: 128, 512>}, {pipeline_mode = #tpu.pipeline_mode<synchronous>, transform_indices = @transform_2, window_bounds = array<i64: 1, 512>}, {pipeline_mode = #tpu.pipeline_mode<synchronous>, transform_indices = @transform_3, window_bounds = array<i64: 512, 384>}, {pipeline_mode = #tpu.pipeline_mode<synchronous>, transform_indices = @transform_4, window_bounds = array<i64: 1, 384>}, {pipeline_mode = #tpu.pipeline_mode<synchronous>, transform_indices = @transform_5, window_bounds = array<i64: 384, 128>}, {pipeline_mode = #tpu.pipeline_mode<synchronous>, transform_indices = @transform_6, window_bounds = array<i64: 1, 128>}, {transform_indices = @transform_7, window_bounds = array<i64: 8, 128>}]} {
    %c0 = arith.constant 0 : index
    %c0_0 = arith.constant 0 : index
    %0 = vector.load %arg1[%c0, %c0_0] : memref<8x128xf32, #tpu.memory_space<vmem>>, vector<8x128xf32>
    %1 = arith.truncf %0 : vector<8x128xf32> to vector<8x128xbf16>
    %c0_1 = arith.constant 0 : index
    %c0_2 = arith.constant 0 : index
    %2 = vector.load %arg2[%c0_1, %c0_2] : memref<128x512xbf16, #tpu.memory_space<vmem>>, vector<128x512xbf16>
    %cst = arith.constant dense<0.000000e+00> : vector<8x512xf32>
    %3 = tpu.matmul %1, %2, %cst {dimension_numbers = #tpu.dot_dimension_numbers<[1], [0], [0], [1], [0, 0, 1, 1], [], []>} : vector<8x128xbf16>, vector<128x512xbf16>, vector<8x512xf32> -> vector<8x512xf32>
    %c0_3 = arith.constant 0 : index
    %c0_4 = arith.constant 0 : index
    %4 = vector.load %arg3[%c0_3, %c0_4] : memref<1x512xf32, #tpu.memory_space<vmem>>, vector<1x512xf32>
    %5 = vector.broadcast %4 : vector<1x512xf32> to vector<8x512xf32>
    %6 = arith.addf %3, %5 : vector<8x512xf32>
    %cst_5 = arith.constant 0.000000e+00 : f32
    %7 = vector.broadcast %cst_5 : f32 to vector<8x512xf32>
    %8 = arith.maximumf %6, %7 : vector<8x512xf32>
    %9 = arith.truncf %8 : vector<8x512xf32> to vector<8x512xbf16>
    %c0_6 = arith.constant 0 : index
    %c0_7 = arith.constant 0 : index
    %10 = vector.load %arg4[%c0_6, %c0_7] : memref<512x384xbf16, #tpu.memory_space<vmem>>, vector<512x384xbf16>
    %cst_8 = arith.constant dense<0.000000e+00> : vector<8x384xf32>
    %11 = tpu.matmul %9, %10, %cst_8 {dimension_numbers = #tpu.dot_dimension_numbers<[1], [0], [0], [1], [0, 0, 1, 1], [], []>} : vector<8x512xbf16>, vector<512x384xbf16>, vector<8x384xf32> -> vector<8x384xf32>
    %c0_9 = arith.constant 0 : index
    %c0_10 = arith.constant 0 : index
    %12 = vector.load %arg5[%c0_9, %c0_10] : memref<1x384xf32, #tpu.memory_space<vmem>>, vector<1x384xf32>
    %13 = vector.broadcast %12 : vector<1x384xf32> to vector<8x384xf32>
    %14 = arith.addf %11, %13 : vector<8x384xf32>
    %cst_11 = arith.constant 0.000000e+00 : f32
    %15 = vector.broadcast %cst_11 : f32 to vector<8x384xf32>
    %16 = arith.maximumf %14, %15 : vector<8x384xf32>
    %17 = arith.truncf %16 : vector<8x384xf32> to vector<8x384xbf16>
    %c0_12 = arith.constant 0 : index
    %c0_13 = arith.constant 0 : index
    %18 = vector.load %arg6[%c0_12, %c0_13] : memref<384x128xbf16, #tpu.memory_space<vmem>>, vector<384x128xbf16>
    %cst_14 = arith.constant dense<0.000000e+00> : vector<8x128xf32>
    %19 = tpu.matmul %17, %18, %cst_14 {dimension_numbers = #tpu.dot_dimension_numbers<[1], [0], [0], [1], [0, 0, 1, 1], [], []>} : vector<8x384xbf16>, vector<384x128xbf16>, vector<8x128xf32> -> vector<8x128xf32>
    %c0_15 = arith.constant 0 : index
    %c0_16 = arith.constant 0 : index
    %20 = vector.load %arg7[%c0_15, %c0_16] : memref<1x128xf32, #tpu.memory_space<vmem>>, vector<1x128xf32>
    %21 = vector.broadcast %20 : vector<1x128xf32> to vector<8x128xf32>
    %22 = arith.addf %19, %21 : vector<8x128xf32>
    %23 = math.tanh %22 : vector<8x128xf32>
    %c0_17 = arith.constant 0 : index
    %c0_18 = arith.constant 0 : index
    %24 = vector.load %arg8[%c0_17, %c0_18] : memref<8x128xf32, #tpu.memory_space<vmem>>, vector<8x128xf32>
    tpu.vector_store %arg8[%c0_17, %c0_18], %23 {strides = array<i32>} : memref<8x128xf32, #tpu.memory_space<vmem>>, vector<8x128xf32>,
    return
  }
  func.func @transform_0(%arg0: i32) -> (i32, i32) {
    %c0_i32 = arith.constant 0 : i32
    %c0_i32_0 = arith.constant 0 : i32
    return %arg0, %c0_i32 : i32, i32
  }
  func.func @transform_1(%arg0: i32) -> (i32, i32) {
    %c0_i32 = arith.constant 0 : i32
    %c0_i32_0 = arith.constant 0 : i32
    %c0_i32_1 = arith.constant 0 : i32
    return %c0_i32, %c0_i32_0 : i32, i32
  }
  func.func @transform_2(%arg0: i32) -> (i32, i32) {
    %c0_i32 = arith.constant 0 : i32
    %c0_i32_0 = arith.constant 0 : i32
    %c0_i32_1 = arith.constant 0 : i32
    return %c0_i32, %c0_i32_0 : i32, i32
  }
  func.func @transform_3(%arg0: i32) -> (i32, i32) {
    %c0_i32 = arith.constant 0 : i32
    %c0_i32_0 = arith.constant 0 : i32
    %c0_i32_1 = arith.constant 0 : i32
    return %c0_i32, %c0_i32_0 : i32, i32
  }
  func.func @transform_4(%arg0: i32) -> (i32, i32) {
    %c0_i32 = arith.constant 0 : i32
    %c0_i32_0 = arith.constant 0 : i32
    %c0_i32_1 = arith.constant 0 : i32
    return %c0_i32, %c0_i32_0 : i32, i32
  }
  func.func @transform_5(%arg0: i32) -> (i32, i32) {
    %c0_i32 = arith.constant 0 : i32
    %c0_i32_0 = arith.constant 0 : i32
    %c0_i32_1 = arith.constant 0 : i32
    return %c0_i32, %c0_i32_0 : i32, i32
  }
  func.func @transform_6(%arg0: i32) -> (i32, i32) {
    %c0_i32 = arith.constant 0 : i32
    %c0_i32_0 = arith.constant 0 : i32
    %c0_i32_1 = arith.constant 0 : i32
    return %c0_i32, %c0_i32_0 : i32, i32
  }
  func.func @transform_7(%arg0: i32) -> (i32, i32) {
    %c0_i32 = arith.constant 0 : i32
    %c0_i32_0 = arith.constant 0 : i32
    return %arg0, %c0_i32 : i32, i32
  }
}

</mosaic_0001>

<llo_original>
// kernel: tpu_custom_call.1
$region0: #{tpu_custom_call.1}
  #allocation0 [shape = 'u32[]', space=smem, size = 0x4, offset = 0x4, fixed_abs, tag = 'smem constant byte address 0x4 - core index']
  #allocation1 [shape = 'u32[144,128]{1,0:T(1,128)}', space=vmem, size = 0x12000, scoped, tag = 'internal scratch']
  %s0 = inlined_call_operand.hbm [shape: f32[8,128], index: 0, kind: input, shape index: {}]
  %s1 = inlined_call_operand.hbm [shape: bf16[128,512], index: 1, kind: input, shape index: {}]
  %s2 = inlined_call_operand.vmem [shape: f32[1,512], index: 2, kind: input, shape index: {}]
  %s3 = inlined_call_operand.hbm [shape: bf16[512,384], index: 3, kind: input, shape index: {}]
  %s4 = inlined_call_operand.vmem [shape: f32[1,384], index: 4, kind: input, shape index: {}]
  %s5 = inlined_call_operand.hbm [shape: bf16[384,128], index: 5, kind: input, shape index: {}]
  %s6 = inlined_call_operand.vmem [shape: f32[1,128], index: 6, kind: input, shape index: {}]
  %s7 = inlined_call_operand.hbm [shape: f32[8,128], index: 7, kind: output, shape index: {}]
  %s8 = sld [smem:[#allocation0]]
  $region54: #{tpu_custom_call.1} parent=0
    _
  %s10 = ssub.s32 1, %s8
  %s11 = scalar_select 0, %s10, %s8
  $region1: #{tpu_custom_call.1} parent=0
    #allocation2 [shape = 'u8[4096]{0}', space=vmem, size = 0x1000, scoped, tag = 'input window, operand 0, single buffered']
    #allocation3 [shape = 's32[1]{0}', space=sflag, size = 0x4, scoped, tag = 'scoped memory for tpu_custom_call.1']
    #allocation4 [shape = 's32[1]{0}', space=sflag, size = 0x4, scoped, tag = 'scoped memory for tpu_custom_call.1']
    #allocation5 [shape = 'u8[131072]{0}', space=vmem, size = 0x20000, scoped, tag = 'input window, operand 1, single buffered']
    #allocation6 [shape = 's32[1]{0}', space=sflag, size = 0x4, scoped, tag = 'scoped memory for tpu_custom_call.1']
    #allocation7 [shape = 'u8[393216]{0}', space=vmem, size = 0x60000, scoped, tag = 'input window, operand 3, single buffered']
    #allocation8 [shape = 'u8[98304]{0}', space=vmem, size = 0x18000, scoped, tag = 'input window, operand 5, single buffered']
    #allocation9 [shape = 's32[1]{0}', space=sflag, size = 0x4, scoped, tag = 'scoped memory for tpu_custom_call.1']
    #allocation10 [shape = 'u8[4096]{0}', space=vmem, size = 0x1000, scoped, tag = 'output window, operand 0, single buffered']
    %12 = vsyncpa [#allocation3], 0
    %13 = vsyncpa [#allocation6], 0
    %14 = vsyncpa [#allocation9], 0
    %15 = vsyncpa [#allocation4], 0
    // Predicated region
    $region2: #{tpu_custom_call.1} parent=1 // pred_check
      _
    $region3: #{tpu_custom_call.1} parent=1 // pred_check_branch
      %17 = sbr.rel (0) target = $region5
    $region4: #{tpu_custom_call.1} parent=1 // pred_region
      %s19 = ssub.s32 128, 128
      %20 = vsyncadd [#allocation3], %s19
      %s22 = sshll.u32 [#allocation2], 4
      %s23 = int_to_ptr.vmem [resolvable:$true] %s22
      %25 = dma.hbm_to_vmem [thread:$0]  %s0, 128, %s23, [#allocation3]
    $region5: #{tpu_custom_call.1} parent=1 // pred_fallthru
      _
    // Predicated region
    $region6: #{tpu_custom_call.1} parent=1 // pred_check
      _
    $region7: #{tpu_custom_call.1} parent=1 // pred_check_branch
      %27 = sbr.rel (0) target = $region9
    $region8: #{tpu_custom_call.1} parent=1 // pred_region
      %s29 = ssub.s32 4096, 4096
      %30 = vsyncadd [#allocation6], %s29
      %s31 = sshll.u32 [#allocation5], 4
      %s32 = int_to_ptr.vmem [resolvable:$true] %s31
      %37 = dma.hbm_to_vmem [thread:$0]  %s1, 4096, %s32, [#allocation6], 256, 256, 16
    $region9: #{tpu_custom_call.1} parent=1 // pred_fallthru
      _
    // Predicated region
    $region10: #{tpu_custom_call.1} parent=1 // pred_check
      _
    $region11: #{tpu_custom_call.1} parent=1 // pred_check_branch
      %39 = sbr.rel (0) target = $region13
    $region12: #{tpu_custom_call.1} parent=1 // pred_region
      _
    $region13: #{tpu_custom_call.1} parent=1 // pred_fallthru
      _
    // Predicated region
    $region14: #{tpu_custom_call.1} parent=1 // pred_check
      _
    $region15: #{tpu_custom_call.1} parent=1 // pred_check_branch
      %41 = sbr.rel (0) target = $region17
    $region16: #{tpu_custom_call.1} parent=1 // pred_region
      %s43 = ssub.s32 12288, 12288
      %44 = vsyncadd [#allocation6], %s43
      %s45 = sshll.u32 [#allocation7], 4
      %s46 = int_to_ptr.vmem [resolvable:$true] %s45
      %51 = dma.hbm_to_vmem [thread:$0]  %s3, 12288, %s46, [#allocation6], 192, 192, 12
    $region17: #{tpu_custom_call.1} parent=1 // pred_fallthru
      _
    // Predicated region
    $region18: #{tpu_custom_call.1} parent=1 // pred_check
      _
    $region19: #{tpu_custom_call.1} parent=1 // pred_check_branch
      %53 = sbr.rel (0) target = $region21
    $region20: #{tpu_custom_call.1} parent=1 // pred_region
      _
    $region21: #{tpu_custom_call.1} parent=1 // pred_fallthru
      _
    // Predicated region
    $region22: #{tpu_custom_call.1} parent=1 // pred_check
      _
    $region23: #{tpu_custom_call.1} parent=1 // pred_check_branch
      %55 = sbr.rel (0) target = $region25
    $region24: #{tpu_custom_call.1} parent=1 // pred_region
      %s57 = ssub.s32 3072, 3072
      %58 = vsyncadd [#allocation9], %s57
      %s59 = sshll.u32 [#allocation8], 4
      %s60 = int_to_ptr.vmem [resolvable:$true] %s59
      %65 = dma.hbm_to_vmem [thread:$0]  %s5, 3072, %s60, [#allocation9], 64, 64, 4
    $region25: #{tpu_custom_call.1} parent=1 // pred_fallthru
      _
    // Predicated region
    $region26: #{tpu_custom_call.1} parent=1 // pred_check
      _
    $region27: #{tpu_custom_call.1} parent=1 // pred_check_branch
      %67 = sbr.rel (0) target = $region29
    $region28: #{tpu_custom_call.1} parent=1 // pred_region
      _
    $region29: #{tpu_custom_call.1} parent=1 // pred_fallthru
      _
    // Predicated region
    $region30: #{tpu_custom_call.1} parent=1 // pred_check
      _
    $region31: #{tpu_custom_call.1} parent=1 // pred_check_branch
      %69 = sbr.rel (0) target = $region33
    $region32: #{tpu_custom_call.1} parent=1 // pred_region
      %70 = dma.done [#allocation3], 128
    $region33: #{tpu_custom_call.1} parent=1 // pred_fallthru
      _
    // Predicated region
    $region34: #{tpu_custom_call.1} parent=1 // pred_check
      _
    $region35: #{tpu_custom_call.1} parent=1 // pred_check_branch
      %72 = sbr.rel (0) target = $region37
    $region36: #{tpu_custom_call.1} parent=1 // pred_region
      %73 = dma.done [#allocation6], 4096
    $region37: #{tpu_custom_call.1} parent=1 // pred_fallthru
      _
    // Predicated region
    $region38: #{tpu_custom_call.1} parent=1 // pred_check
      _
    $region39: #{tpu_custom_call.1} parent=1 // pred_check_branch
      %75 = sbr.rel (0) target = $region41
    $region40: #{tpu_custom_call.1} parent=1 // pred_region
      %76 = dma.done [#allocation6], 12288
    $region41: #{tpu_custom_call.1} parent=1 // pred_fallthru
      _
    // Predicated region
    $region42: #{tpu_custom_call.1} parent=1 // pred_check
      _
    $region43: #{tpu_custom_call.1} parent=1 // pred_check_branch
      %78 = sbr.rel (0) target = $region45
    $region44: #{tpu_custom_call.1} parent=1 // pred_region
      %79 = dma.done [#allocation9], 3072
    $region45: #{tpu_custom_call.1} parent=1 // pred_fallthru
      _
    %v81 = vld [vmem:[#allocation2] sm:$0xff]
    %v82 = vpack.c.bf16 %v81, %v81
    %v83 = vld [vmem:[#allocation5] sm:$0xff]
    %v84 = vld [vmem:[#allocation5 + $0x8] sm:$0xff]
    %v85 = vld [vmem:[#allocation5 + $0x10] sm:$0xff]
    %v86 = vld [vmem:[#allocation5 + $0x18] sm:$0xff]
    %v87 = vld [vmem:[#allocation5 + $0x20] sm:$0xff]
    %v88 = vld [vmem:[#allocation5 + $0x28] sm:$0xff]
    %v89 = vld [vmem:[#allocation5 + $0x30] sm:$0xff]
    %v90 = vld [vmem:[#allocation5 + $0x38] sm:$0xff]
    %v91 = vld [vmem:[#allocation5 + $0x40] sm:$0xff]
    %v92 = vld [vmem:[#allocation5 + $0x48] sm:$0xff]
    %v93 = vld [vmem:[#allocation5 + $0x50] sm:$0xff]
    %v94 = vld [vmem:[#allocation5 + $0x58] sm:$0xff]
    %v95 = vld [vmem:[#allocation5 + $0x60] sm:$0xff]
    %v96 = vld [vmem:[#allocation5 + $0x68] sm:$0xff]
    %v97 = vld [vmem:[#allocation5 + $0x70] sm:$0xff]
    %v98 = vld [vmem:[#allocation5 + $0x78] sm:$0xff]
    %v99 = vld [vmem:[#allocation5 + $0x80] sm:$0xff]
    %v100 = vld [vmem:[#allocation5 + $0x88] sm:$0xff]
    %v101 = vld [vmem:[#allocation5 + $0x90] sm:$0xff]
    %v102 = vld [vmem:[#allocation5 + $0x98] sm:$0xff]
    %v103 = vld [vmem:[#allocation5 + $0xa0] sm:$0xff]
    %v104 = vld [vmem:[#allocation5 + $0xa8] sm:$0xff]
    %v105 = vld [vmem:[#allocation5 + $0xb0] sm:$0xff]
    %v106 = vld [vmem:[#allocation5 + $0xb8] sm:$0xff]
    %v107 = vld [vmem:[#allocation5 + $0xc0] sm:$0xff]
    %v108 = vld [vmem:[#allocation5 + $0xc8] sm:$0xff]
    %v109 = vld [vmem:[#allocation5 + $0xd0] sm:$0xff]
    %v110 = vld [vmem:[#allocation5 + $0xd8] sm:$0xff]
    %v111 = vld [vmem:[#allocation5 + $0xe0] sm:$0xff]
    %v112 = vld [vmem:[#allocation5 + $0xe8] sm:$0xff]
    %v113 = vld [vmem:[#allocation5 + $0xf0] sm:$0xff]
    %v114 = vld [vmem:[#allocation5 + $0xf8] sm:$0xff]
    %v115 = vld [vmem:[%s2] sm:$0xf]
    %v117 = vlaneseq
    %v118 = vshrl.u32 %v117, 7
    %v119 = vsub.s32 0, %v118
    %v120 = vrot.slane %v115, %v119
    %v121 = vlaneseq
    %v122 = vshrl.u32 %v121, 7
    %v123 = vsub.s32 1, %v122
    %v124 = vrot.slane %v115, %v123
    %v125 = vlaneseq
    %v126 = vshrl.u32 %v125, 7
    %v127 = vsub.s32 2, %v126
    %v128 = vrot.slane %v115, %v127
    %v129 = vlaneseq
    %v130 = vshrl.u32 %v129, 7
    %v131 = vsub.s32 3, %v130
    %v132 = vrot.slane %v115, %v131
    %v169 = vunpack.c.l.b16 %v83
    %v170 = vunpack.c.h.b16 %v83
    %v171 = vunpack.c.l.b16 %v84
    %v172 = vunpack.c.h.b16 %v84
    %v173 = vunpack.c.l.b16 %v85
    %v174 = vunpack.c.h.b16 %v85
    %v175 = vunpack.c.l.b16 %v86
    %v176 = vunpack.c.h.b16 %v86
    %v177 = vunpack.c.l.b16 %v87
    %v178 = vunpack.c.h.b16 %v87
    %v179 = vunpack.c.l.b16 %v88
    %v180 = vunpack.c.h.b16 %v88
    %v181 = vunpack.c.l.b16 %v89
    %v182 = vunpack.c.h.b16 %v89
    %v183 = vunpack.c.l.b16 %v90
    %v184 = vunpack.c.h.b16 %v90
    %v185 = vunpack.c.l.b16 %v91
    %v186 = vunpack.c.h.b16 %v91
    %v187 = vunpack.c.l.b16 %v92
    %v188 = vunpack.c.h.b16 %v92
    %v189 = vunpack.c.l.b16 %v93
    %v190 = vunpack.c.h.b16 %v93
    %v191 = vunpack.c.l.b16 %v94
    %v192 = vunpack.c.h.b16 %v94
    %v193 = vunpack.c.l.b16 %v95
    %v194 = vunpack.c.h.b16 %v95
    %v195 = vunpack.c.l.b16 %v96
    %v196 = vunpack.c.h.b16 %v96
    %v197 = vunpack.c.l.b16 %v97
    %v198 = vunpack.c.h.b16 %v97
    %v199 = vunpack.c.l.b16 %v98
    %v200 = vunpack.c.h.b16 %v98
    %v201 = vunpack.c.l.b16 %v99
    %v202 = vunpack.c.h.b16 %v99
    %v203 = vunpack.c.l.b16 %v100
    %v204 = vunpack.c.h.b16 %v100
    %v205 = vunpack.c.l.b16 %v101
    %v206 = vunpack.c.h.b16 %v101
    %v207 = vunpack.c.l.b16 %v102
    %v208 = vunpack.c.h.b16 %v102
    %v209 = vunpack.c.l.b16 %v103
    %v210 = vunpack.c.h.b16 %v103
    %v211 = vunpack.c.l.b16 %v104
    %v212 = vunpack.c.h.b16 %v104
    %v213 = vunpack.c.l.b16 %v105
    %v214 = vunpack.c.h.b16 %v105
    %v215 = vunpack.c.l.b16 %v106
    %v216 = vunpack.c.h.b16 %v106
    %v217 = vunpack.c.l.b16 %v107
    %v218 = vunpack.c.h.b16 %v107
    %v219 = vunpack.c.l.b16 %v108
    %v220 = vunpack.c.h.b16 %v108
    %v221 = vunpack.c.l.b16 %v109
    %v222 = vunpack.c.h.b16 %v109
    %v223 = vunpack.c.l.b16 %v110
    %v224 = vunpack.c.h.b16 %v110
    %v225 = vunpack.c.l.b16 %v111
    %v226 = vunpack.c.h.b16 %v111
    %v227 = vunpack.c.l.b16 %v112
    %v228 = vunpack.c.h.b16 %v112
    %v229 = vunpack.c.l.b16 %v113
    %v230 = vunpack.c.h.b16 %v113
    %v231 = vunpack.c.l.b16 %v114
    %v232 = vunpack.c.h.b16 %v114
    %v233 = vpack.c.b16 %v173, %v169
    %v234 = vpack.c.b16 %v174, %v170
    %v235 = vpack.c.b16 %v175, %v171
    %v236 = vpack.c.b16 %v176, %v172
    %v237 = vpack.c.b16 %v181, %v177
    %v238 = vpack.c.b16 %v182, %v178
    %v239 = vpack.c.b16 %v183, %v179
    %v240 = vpack.c.b16 %v184, %v180
    %v241 = vpack.c.b16 %v189, %v185
    %v242 = vpack.c.b16 %v190, %v186
    %v243 = vpack.c.b16 %v191, %v187
    %v244 = vpack.c.b16 %v192, %v188
    %v245 = vpack.c.b16 %v197, %v193
    %v246 = vpack.c.b16 %v198, %v194
    %v247 = vpack.c.b16 %v199, %v195
    %v248 = vpack.c.b16 %v200, %v196
    %v249 = vpack.c.b16 %v205, %v201
    %v250 = vpack.c.b16 %v206, %v202
    %v251 = vpack.c.b16 %v207, %v203
    %v252 = vpack.c.b16 %v208, %v204
    %v253 = vpack.c.b16 %v213, %v209
    %v254 = vpack.c.b16 %v214, %v210
    %v255 = vpack.c.b16 %v215, %v211
    %v256 = vpack.c.b16 %v216, %v212
    %v257 = vpack.c.b16 %v221, %v217
    %v258 = vpack.c.b16 %v222, %v218
    %v259 = vpack.c.b16 %v223, %v219
    %v260 = vpack.c.b16 %v224, %v220
    %v261 = vpack.c.b16 %v229, %v225
    %v262 = vpack.c.b16 %v230, %v226
    %v263 = vpack.c.b16 %v231, %v227
    %v264 = vpack.c.b16 %v232, %v228
    %297 = vmatprep.subr.bf16.mxu0 %v234
    %298 = vmatpush1.bf16.msra.mxu0 %v233
    %299 = vmatprep.subr.bf16.mxu0 %v238
    %300 = vmatpush1.bf16.msra.mxu0 %v237
    %301 = vmatprep.subr.bf16.mxu0 %v242
    %302 = vmatpush1.bf16.msra.mxu0 %v241
    %303 = vmatprep.subr.bf16.mxu0 %v246
    %304 = vmatpush1.bf16.msra.mxu0 %v245
    %305 = vmatprep.subr.bf16.mxu0 %v250
    %306 = vmatpush1.bf16.msra.mxu0 %v249
    %307 = vmatprep.subr.bf16.mxu0 %v254
    %308 = vmatpush1.bf16.msra.mxu0 %v253
    %309 = vmatprep.subr.bf16.mxu0 %v258
    %310 = vmatpush1.bf16.msra.mxu0 %v257
    %311 = vmatprep.subr.bf16.mxu0 %v262
    %312 = vmatpush1.bf16.msra.mxu0 %v261
    %313 = vmatprep.subr.bf16.mxu0 0
    %314 = vmatpush1.bf16.msra.mxu0 0
    %315 = vmatprep.subr.bf16.mxu0 0
    %316 = vmatpush1.bf16.msra.mxu0 0
    %317 = vmatprep.subr.bf16.mxu0 0
    %318 = vmatpush1.bf16.msra.mxu0 0
    %319 = vmatprep.subr.bf16.mxu0 0
    %320 = vmatpush1.bf16.msra.mxu0 0
    %321 = vmatprep.subr.bf16.mxu0 0
    %322 = vmatpush1.bf16.msra.mxu0 0
    %323 = vmatprep.subr.bf16.mxu0 0
    %324 = vmatpush1.bf16.msra.mxu0 0
    %325 = vmatprep.subr.bf16.mxu0 0
    %326 = vmatpush1.bf16.msra.mxu0 0
    %327 = vmatprep.subr.bf16.mxu0 0
    %328 = vmatpush1.bf16.msra.mxu0 0
    %329 = vmatprep.mubr.bf16.mxu0 0
    %330 = vmatmul.mubr.bf16.gmra.mrb[0].mxu0 %v82
    %v331 = vpop.f32.mrb[0].mxu0
    %v332 = vadd.f32 %v120, %v331
    %v333 = vpop.f32.mrb[0].mxu0
    %v334 = vadd.f32 %v124, %v333
    %v335 = vpop.f32.mrb[0].mxu0
    %v336 = vpop.f32.mrb[0].mxu0
    %337 = vdwg.mxu0
    %338 = vmatprep.subr.bf16.mxu0 %v236
    %339 = vmatpush1.bf16.msra.mxu0 %v235
    %340 = vmatprep.subr.bf16.mxu0 %v240
    %341 = vmatpush1.bf16.msra.mxu0 %v239
    %342 = vmatprep.subr.bf16.mxu0 %v244
    %343 = vmatpush1.bf16.msra.mxu0 %v243
    %344 = vmatprep.subr.bf16.mxu0 %v248
    %345 = vmatpush1.bf16.msra.mxu0 %v247
    %346 = vmatprep.subr.bf16.mxu0 %v252
    %347 = vmatpush1.bf16.msra.mxu0 %v251
    %348 = vmatprep.subr.bf16.mxu0 %v256
    %349 = vmatpush1.bf16.msra.mxu0 %v255
    %350 = vmatprep.subr.bf16.mxu0 %v260
    %351 = vmatpush1.bf16.msra.mxu0 %v259
    %352 = vmatprep.subr.bf16.mxu0 %v264
    %353 = vmatpush1.bf16.msra.mxu0 %v263
    %354 = vmatprep.subr.bf16.mxu0 0
    %355 = vmatpush1.bf16.msra.mxu0 0
    %356 = vmatprep.subr.bf16.mxu0 0
    %357 = vmatpush1.bf16.msra.mxu0 0
    %358 = vmatprep.subr.bf16.mxu0 0
    %359 = vmatpush1.bf16.msra.mxu0 0
    %360 = vmatprep.subr.bf16.mxu0 0
    %361 = vmatpush1.bf16.msra.mxu0 0
    %362 = vmatprep.subr.bf16.mxu0 0
    %363 = vmatpush1.bf16.msra.mxu0 0
    %364 = vmatprep.subr.bf16.mxu0 0
    %365 = vmatpush1.bf16.msra.mxu0 0
    %366 = vmatprep.subr.bf16.mxu0 0
    %367 = vmatpush1.bf16.msra.mxu0 0
    %368 = vmatprep.subr.bf16.mxu0 0
    %369 = vmatpush1.bf16.msra.mxu0 0
    %370 = vmatprep.mubr.bf16.mxu0 0
    %371 = vmatmul.mubr.bf16.gmra.mrb[0].mxu0 %v82
    %v372 = vpop.f32.mrb[0].mxu0
    %v373 = vadd.f32 %v128, %v372
    %v374 = vpop.f32.mrb[0].mxu0
    %v375 = vadd.f32 %v132, %v374
    %v376 = vpop.f32.mrb[0].mxu0
    %v377 = vpop.f32.mrb[0].mxu0
    %378 = vdwg.mxu0
    %v379 = vmax.f32 %v332, 0.0
    %v380 = vmax.f32 %v334, 0.0
    %v381 = vmax.f32 %v373, 0.0
    %v382 = vmax.f32 %v375, 0.0
    %v383 = vpack.c.bf16 %v379, %v379
    %v384 = vpack.c.bf16 %v380, %v380
    %v385 = vpack.c.bf16 %v381, %v381
    %v386 = vpack.c.bf16 %v382, %v382
    %v387 = vld [vmem:[#allocation7] sm:$0xff]
    %v388 = vld [vmem:[#allocation7 + $0x8] sm:$0xf]
    %v389 = vld [vmem:[#allocation7 + $0xc] sm:$0xff]
    %v390 = vld [vmem:[#allocation7 + $0x14] sm:$0xf]
    %v391 = vld [vmem:[#allocation7 + $0x18] sm:$0xff]
    %v392 = vld [vmem:[#allocation7 + $0x20] sm:$0xf]
    %v393 = vld [vmem:[#allocation7 + $0x24] sm:$0xff]
    %v394 = vld [vmem:[#allocation7 + $0x2c] sm:$0xf]
    %v395 = vld [vmem:[#allocation7 + $0x30] sm:$0xff]
    %v396 = vld [vmem:[#allocation7 + $0x38] sm:$0xf]
    %v397 = vld [vmem:[#allocation7 + $0x3c] sm:$0xff]
    %v398 = vld [vmem:[#allocation7 + $0x44] sm:$0xf]
    %v399 = vld [vmem:[#allocation7 + $0x48] sm:$0xff]
    %v400 = vld [vmem:[#allocation7 + $0x50] sm:$0xf]
    %v401 = vld [vmem:[#allocation7 + $0x54] sm:$0xff]
    %v402 = vld [vmem:[#allocation7 + $0x5c] sm:$0xf]
    %v403 = vld [vmem:[#allocation7 + $0x60] sm:$0xff]
    %v404 = vld [vmem:[#allocation7 + $0x68] sm:$0xf]
    %v405 = vld [vmem:[#allocation7 + $0x6c] sm:$0xff]
    %v406 = vld [vmem:[#allocation7 + $0x74] sm:$0xf]
    %v407 = vld [vmem:[#allocation7 + $0x78] sm:$0xff]
    %v408 = vld [vmem:[#allocation7 + $0x80] sm:$0xf]
    %v409 = vld [vmem:[#allocation7 + $0x84] sm:$0xff]
    %v410 = vld [vmem:[#allocation7 + $0x8c] sm:$0xf]
    %v411 = vld [vmem:[#allocation7 + $0x90] sm:$0xff]
    %v412 = vld [vmem:[#allocation7 + $0x98] sm:$0xf]
    %v413 = vld [vmem:[#allocation7 + $0x9c] sm:$0xff]
    %v414 = vld [vmem:[#allocation7 + $0xa4] sm:$0xf]
    %v415 = vld [vmem:[#allocation7 + $0xa8] sm:$0xff]
    %v416 = vld [vmem:[#allocation7 + $0xb0] sm:$0xf]
    %v417 = vld [vmem:[#allocation7 + $0xb4] sm:$0xff]
    %v418 = vld [vmem:[#allocation7 + $0xbc] sm:$0xf]
    %v419 = vld [vmem:[#allocation7 + $0xc0] sm:$0xff]
    %v420 = vld [vmem:[#allocation7 + $0xc8] sm:$0xf]
    %v421 = vld [vmem:[#allocation7 + $0xcc] sm:$0xff]
    %v422 = vld [vmem:[#allocation7 + $0xd4] sm:$0xf]
    %v423 = vld [vmem:[#allocation7 + $0xd8] sm:$0xff]
    %v424 = vld [vmem:[#allocation7 + $0xe0] sm:$0xf]
    %v425 = vld [vmem:[#allocation7 + $0xe4] sm:$0xff]
    %v426 = vld [vmem:[#allocation7 + $0xec] sm:$0xf]
    %v427 = vld [vmem:[#allocation7 + $0xf0] sm:$0xff]
    %v428 = vld [vmem:[#allocation7 + $0xf8] sm:$0xf]
    %v429 = vld [vmem:[#allocation7 + $0xfc] sm:$0xff]
    %v430 = vld [vmem:[#allocation7 + $0x104] sm:$0xf]
    %v431 = vld [vmem:[#allocation7 + $0x108] sm:$0xff]
    %v432 = vld [vmem:[#allocation7 + $0x110] sm:$0xf]
    %v433 = vld [vmem:[#allocation7 + $0x114] sm:$0xff]
    %v434 = vld [vmem:[#allocation7 + $0x11c] sm:$0xf]
    %v435 = vld [vmem:[#allocation7 + $0x120] sm:$0xff]
    %v436 = vld [vmem:[#allocation7 + $0x128] sm:$0xf]
    %v437 = vld [vmem:[#allocation7 + $0x12c] sm:$0xff]
    %v438 = vld [vmem:[#allocation7 + $0x134] sm:$0xf]
    %v439 = vld [vmem:[#allocation7 + $0x138] sm:$0xff]
    %v440 = vld [vmem:[#allocation7 + $0x140] sm:$0xf]
    %v441 = vld [vmem:[#allocation7 + $0x144] sm:$0xff]
    %v442 = vld [vmem:[#allocation7 + $0x14c] sm:$0xf]
    %v443 = vld [vmem:[#allocation7 + $0x150] sm:$0xff]
    %v444 = vld [vmem:[#allocation7 + $0x158] sm:$0xf]
    %v445 = vld [vmem:[#allocation7 + $0x15c] sm:$0xff]
    %v446 = vld [vmem:[#allocation7 + $0x164] sm:$0xf]
    %v447 = vld [vmem:[#allocation7 + $0x168] sm:$0xff]
    %v448 = vld [vmem:[#allocation7 + $0x170] sm:$0xf]
    %v449 = vld [vmem:[#allocation7 + $0x174] sm:$0xff]
    %v450 = vld [vmem:[#allocation7 + $0x17c] sm:$0xf]
    %v451 = vld [vmem:[#allocation7 + $0x180] sm:$0xff]
    %v452 = vld [vmem:[#allocation7 + $0x188] sm:$0xf]
    %v453 = vld [vmem:[#allocation7 + $0x18c] sm:$0xff]
    %v454 = vld [vmem:[#allocation7 + $0x194] sm:$0xf]
    %v455 = vld [vmem:[#allocation7 + $0x198] sm:$0xff]
    %v456 = vld [vmem:[#allocation7 + $0x1a0] sm:$0xf]
    %v457 = vld [vmem:[#allocation7 + $0x1a4] sm:$0xff]
    %v458 = vld [vmem:[#allocation7 + $0x1ac] sm:$0xf]
    %v459 = vld [vmem:[#allocation7 + $0x1b0] sm:$0xff]
    %v460 = vld [vmem:[#allocation7 + $0x1b8] sm:$0xf]
    %v461 = vld [vmem:[#allocation7 + $0x1bc] sm:$0xff]
    %v462 = vld [vmem:[#allocation7 + $0x1c4] sm:$0xf]
    %v463 = vld [vmem:[#allocation7 + $0x1c8] sm:$0xff]
    %v464 = vld [vmem:[#allocation7 + $0x1d0] sm:$0xf]
    %v465 = vld [vmem:[#allocation7 + $0x1d4] sm:$0xff]
    %v466 = vld [vmem:[#allocation7 + $0x1dc] sm:$0xf]
    %v467 = vld [vmem:[#allocation7 + $0x1e0] sm:$0xff]
    %v468 = vld [vmem:[#allocation7 + $0x1e8] sm:$0xf]
    %v469 = vld [vmem:[#allocation7 + $0x1ec] sm:$0xff]
    %v470 = vld [vmem:[#allocation7 + $0x1f4] sm:$0xf]
    %v471 = vld [vmem:[#allocation7 + $0x1f8] sm:$0xff]
    %v472 = vld [vmem:[#allocation7 + $0x200] sm:$0xf]
    %v473 = vld [vmem:[#allocation7 + $0x204] sm:$0xff]
    %v474 = vld [vmem:[#allocation7 + $0x20c] sm:$0xf]
    %v475 = vld [vmem:[#allocation7 + $0x210] sm:$0xff]
    %v476 = vld [vmem:[#allocation7 + $0x218] sm:$0xf]
    %v477 = vld [vmem:[#allocation7 + $0x21c] sm:$0xff]
    %v478 = vld [vmem:[#allocation7 + $0x224] sm:$0xf]
    %v479 = vld [vmem:[#allocation7 + $0x228] sm:$0xff]
    %v480 = vld [vmem:[#allocation7 + $0x230] sm:$0xf]
    %v481 = vld [vmem:[#allocation7 + $0x234] sm:$0xff]
    %v482 = vld [vmem:[#allocation7 + $0x23c] sm:$0xf]
    %v483 = vld [vmem:[#allocation7 + $0x240] sm:$0xff]
    %v484 = vld [vmem:[#allocation7 + $0x248] sm:$0xf]
    %v485 = vld [vmem:[#allocation7 + $0x24c] sm:$0xff]
    %v486 = vld [vmem:[#allocation7 + $0x254] sm:$0xf]
    %v487 = vld [vmem:[#allocation7 + $0x258] sm:$0xff]
    %v488 = vld [vmem:[#allocation7 + $0x260] sm:$0xf]
    %v489 = vld [vmem:[#allocation7 + $0x264] sm:$0xff]
    %v490 = vld [vmem:[#allocation7 + $0x26c] sm:$0xf]
    %v491 = vld [vmem:[#allocation7 + $0x270] sm:$0xff]
    %v492 = vld [vmem:[#allocation7 + $0x278] sm:$0xf]
    %v493 = vld [vmem:[#allocation7 + $0x27c] sm:$0xff]
    %v494 = vld [vmem:[#allocation7 + $0x284] sm:$0xf]
    %v495 = vld [vmem:[#allocation7 + $0x288] sm:$0xff]
    %v496 = vld [vmem:[#allocation7 + $0x290] sm:$0xf]
    %v497 = vld [vmem:[#allocation7 + $0x294] sm:$0xff]
    %v498 = vld [vmem:[#allocation7 + $0x29c] sm:$0xf]
    %v499 = vld [vmem:[#allocation7 + $0x2a0] sm:$0xff]
    %v500 = vld [vmem:[#allocation7 + $0x2a8] sm:$0xf]
    %v501 = vld [vmem:[#allocation7 + $0x2ac] sm:$0xff]
    %v502 = vld [vmem:[#allocation7 + $0x2b4] sm:$0xf]
    %v503 = vld [vmem:[#allocation7 + $0x2b8] sm:$0xff]
    %v504 = vld [vmem:[#allocation7 + $0x2c0] sm:$0xf]
    %v505 = vld [vmem:[#allocation7 + $0x2c4] sm:$0xff]
    %v506 = vld [vmem:[#allocation7 + $0x2cc] sm:$0xf]
    %v507 = vld [vmem:[#allocation7 + $0x2d0] sm:$0xff]
    %v508 = vld [vmem:[#allocation7 + $0x2d8] sm:$0xf]
    %v509 = vld [vmem:[#allocation7 + $0x2dc] sm:$0xff]
    %v510 = vld [vmem:[#allocation7 + $0x2e4] sm:$0xf]
    %v511 = vld [vmem:[#allocation7 + $0x2e8] sm:$0xff]
    %v512 = vld [vmem:[#allocation7 + $0x2f0] sm:$0xf]
    %v513 = vld [vmem:[#allocation7 + $0x2f4] sm:$0xff]
    %v514 = vld [vmem:[#allocation7 + $0x2fc] sm:$0xf]
    %v515 = vld [vmem:[%s4] sm:$0x7]
    %v517 = vlaneseq
    %v518 = vshrl.u32 %v517, 7
    %v519 = vsub.s32 0, %v518
    %v520 = vrot.slane %v515, %v519
    %v521 = vlaneseq
    %v522 = vshrl.u32 %v521, 7
    %v523 = vsub.s32 1, %v522
    %v524 = vrot.slane %v515, %v523
    %v525 = vlaneseq
    %v526 = vshrl.u32 %v525, 7
    %v527 = vsub.s32 2, %v526
    %v528 = vrot.slane %v515, %v527
    %v660 = vunpack.c.l.b16 %v387
    %v661 = vunpack.c.h.b16 %v387
    %v662 = vunpack.c.l.b16 %v388
    %v663 = vunpack.c.l.b16 %v389
    %v664 = vunpack.c.h.b16 %v389
    %v665 = vunpack.c.l.b16 %v390
    %v666 = vunpack.c.l.b16 %v391
    %v667 = vunpack.c.h.b16 %v391
    %v668 = vunpack.c.l.b16 %v392
    %v669 = vunpack.c.l.b16 %v393
    %v670 = vunpack.c.h.b16 %v393
    %v671 = vunpack.c.l.b16 %v394
    %v672 = vunpack.c.l.b16 %v395
    %v673 = vunpack.c.h.b16 %v395
    %v674 = vunpack.c.l.b16 %v396
    %v675 = vunpack.c.l.b16 %v397
    %v676 = vunpack.c.h.b16 %v397
    %v677 = vunpack.c.l.b16 %v398
    %v678 = vunpack.c.l.b16 %v399
    %v679 = vunpack.c.h.b16 %v399
    %v680 = vunpack.c.l.b16 %v400
    %v681 = vunpack.c.l.b16 %v401
    %v682 = vunpack.c.h.b16 %v401
    %v683 = vunpack.c.l.b16 %v402
    %v684 = vunpack.c.l.b16 %v403
    %v685 = vunpack.c.h.b16 %v403
    %v686 = vunpack.c.l.b16 %v404
    %v687 = vunpack.c.l.b16 %v405
    %v688 = vunpack.c.h.b16 %v405
    %v689 = vunpack.c.l.b16 %v406
    %v690 = vunpack.c.l.b16 %v407
    %v691 = vunpack.c.h.b16 %v407
    %v692 = vunpack.c.l.b16 %v408
    %v693 = vunpack.c.l.b16 %v409
    %v694 = vunpack.c.h.b16 %v409
    %v695 = vunpack.c.l.b16 %v410
    %v696 = vunpack.c.l.b16 %v411
    %v697 = vunpack.c.h.b16 %v411
    %v698 = vunpack.c.l.b16 %v412
    %v699 = vunpack.c.l.b16 %v413
    %v700 = vunpack.c.h.b16 %v413
    %v701 = vunpack.c.l.b16 %v414
    %v702 = vunpack.c.l.b16 %v415
    %v703 = vunpack.c.h.b16 %v415
    %v704 = vunpack.c.l.b16 %v416
    %v705 = vunpack.c.l.b16 %v417
    %v706 = vunpack.c.h.b16 %v417
    %v707 = vunpack.c.l.b16 %v418
    %v708 = vunpack.c.l.b16 %v419
    %v709 = vunpack.c.h.b16 %v419
    %v710 = vunpack.c.l.b16 %v420
    %v711 = vunpack.c.l.b16 %v421
    %v712 = vunpack.c.h.b16 %v421
    %v713 = vunpack.c.l.b16 %v422
    %v714 = vunpack.c.l.b16 %v423
    %v715 = vunpack.c.h.b16 %v423
    %v716 = vunpack.c.l.b16 %v424
    %v717 = vunpack.c.l.b16 %v425
    %v718 = vunpack.c.h.b16 %v425
    %v719 = vunpack.c.l.b16 %v426
    %v720 = vunpack.c.l.b16 %v427
    %v721 = vunpack.c.h.b16 %v427
    %v722 = vunpack.c.l.b16 %v428
    %v723 = vunpack.c.l.b16 %v429
    %v724 = vunpack.c.h.b16 %v429
    %v725 = vunpack.c.l.b16 %v430
    %v726 = vunpack.c.l.b16 %v431
    %v727 = vunpack.c.h.b16 %v431
    %v728 = vunpack.c.l.b16 %v432
    %v729 = vunpack.c.l.b16 %v433
    %v730 = vunpack.c.h.b16 %v433
    %v731 = vunpack.c.l.b16 %v434
    %v732 = vunpack.c.l.b16 %v435
    %v733 = vunpack.c.h.b16 %v435
    %v734 = vunpack.c.l.b16 %v436
    %v735 = vunpack.c.l.b16 %v437
    %v736 = vunpack.c.h.b16 %v437
    %v737 = vunpack.c.l.b16 %v438
    %v738 = vunpack.c.l.b16 %v439
    %v739 = vunpack.c.h.b16 %v439
    %v740 = vunpack.c.l.b16 %v440
    %v741 = vunpack.c.l.b16 %v441
    %v742 = vunpack.c.h.b16 %v441
    %v743 = vunpack.c.l.b16 %v442
    %v744 = vunpack.c.l.b16 %v443
    %v745 = vunpack.c.h.b16 %v443
    %v746 = vunpack.c.l.b16 %v444
    %v747 = vunpack.c.l.b16 %v445
    %v748 = vunpack.c.h.b16 %v445
    %v749 = vunpack.c.l.b16 %v446
    %v750 = vunpack.c.l.b16 %v447
    %v751 = vunpack.c.h.b16 %v447
    %v752 = vunpack.c.l.b16 %v448
    %v753 = vunpack.c.l.b16 %v449
    %v754 = vunpack.c.h.b16 %v449
    %v755 = vunpack.c.l.b16 %v450
    %v756 = vunpack.c.l.b16 %v451
    %v757 = vunpack.c.h.b16 %v451
    %v758 = vunpack.c.l.b16 %v452
    %v759 = vunpack.c.l.b16 %v453
    %v760 = vunpack.c.h.b16 %v453
    %v761 = vunpack.c.l.b16 %v454
    %v762 = vunpack.c.l.b16 %v455
    %v763 = vunpack.c.h.b16 %v455
    %v764 = vunpack.c.l.b16 %v456
    %v765 = vunpack.c.l.b16 %v457
    %v766 = vunpack.c.h.b16 %v457
    %v767 = vunpack.c.l.b16 %v458
    %v768 = vunpack.c.l.b16 %v459
    %v769 = vunpack.c.h.b16 %v459
    %v770 = vunpack.c.l.b16 %v460
    %v771 = vunpack.c.l.b16 %v461
    %v772 = vunpack.c.h.b16 %v461
    %v773 = vunpack.c.l.b16 %v462
    %v774 = vunpack.c.l.b16 %v463
    %v775 = vunpack.c.h.b16 %v463
    %v776 = vunpack.c.l.b16 %v464
    %v777 = vunpack.c.l.b16 %v465
    %v778 = vunpack.c.h.b16 %v465
    %v779 = vunpack.c.l.b16 %v466
    %v780 = vunpack.c.l.b16 %v467
    %v781 = vunpack.c.h.b16 %v467
    %v782 = vunpack.c.l.b16 %v468
    %v783 = vunpack.c.l.b16 %v469
    %v784 = vunpack.c.h.b16 %v469
    %v785 = vunpack.c.l.b16 %v470
    %v786 = vunpack.c.l.b16 %v471
    %v787 = vunpack.c.h.b16 %v471
    %v788 = vunpack.c.l.b16 %v472
    %v789 = vunpack.c.l.b16 %v473
    %v790 = vunpack.c.h.b16 %v473
    %v791 = vunpack.c.l.b16 %v474
    %v792 = vunpack.c.l.b16 %v475
    %v793 = vunpack.c.h.b16 %v475
    %v794 = vunpack.c.l.b16 %v476
    %v795 = vunpack.c.l.b16 %v477
    %v796 = vunpack.c.h.b16 %v477
    %v797 = vunpack.c.l.b16 %v478
    %v798 = vunpack.c.l.b16 %v479
    %v799 = vunpack.c.h.b16 %v479
    %v800 = vunpack.c.l.b16 %v480
    %v801 = vunpack.c.l.b16 %v481
    %v802 = vunpack.c.h.b16 %v481
    %v803 = vunpack.c.l.b16 %v482
    %v804 = vunpack.c.l.b16 %v483
    %v805 = vunpack.c.h.b16 %v483
    %v806 = vunpack.c.l.b16 %v484
    %v807 = vunpack.c.l.b16 %v485
    %v808 = vunpack.c.h.b16 %v485
    %v809 = vunpack.c.l.b16 %v486
    %v810 = vunpack.c.l.b16 %v487
    %v811 = vunpack.c.h.b16 %v487
    %v812 = vunpack.c.l.b16 %v488
    %v813 = vunpack.c.l.b16 %v489
    %v814 = vunpack.c.h.b16 %v489
    %v815 = vunpack.c.l.b16 %v490
    %v816 = vunpack.c.l.b16 %v491
    %v817 = vunpack.c.h.b16 %v491
    %v818 = vunpack.c.l.b16 %v492
    %v819 = vunpack.c.l.b16 %v493
    %v820 = vunpack.c.h.b16 %v493
    %v821 = vunpack.c.l.b16 %v494
    %v822 = vunpack.c.l.b16 %v495
    %v823 = vunpack.c.h.b16 %v495
    %v824 = vunpack.c.l.b16 %v496
    %v825 = vunpack.c.l.b16 %v497
    %v826 = vunpack.c.h.b16 %v497
    %v827 = vunpack.c.l.b16 %v498
    %v828 = vunpack.c.l.b16 %v499
    %v829 = vunpack.c.h.b16 %v499
    %v830 = vunpack.c.l.b16 %v500
    %v831 = vunpack.c.l.b16 %v501
    %v832 = vunpack.c.h.b16 %v501
    %v833 = vunpack.c.l.b16 %v502
    %v834 = vunpack.c.l.b16 %v503
    %v835 = vunpack.c.h.b16 %v503
    %v836 = vunpack.c.l.b16 %v504
    %v837 = vunpack.c.l.b16 %v505
    %v838 = vunpack.c.h.b16 %v505
    %v839 = vunpack.c.l.b16 %v506
    %v840 = vunpack.c.l.b16 %v507
    %v841 = vunpack.c.h.b16 %v507
    %v842 = vunpack.c.l.b16 %v508
    %v843 = vunpack.c.l.b16 %v509
    %v844 = vunpack.c.h.b16 %v509
    %v845 = vunpack.c.l.b16 %v510
    %v846 = vunpack.c.l.b16 %v511
    %v847 = vunpack.c.h.b16 %v511
    %v848 = vunpack.c.l.b16 %v512
    %v849 = vunpack.c.l.b16 %v513
    %v850 = vunpack.c.h.b16 %v513
    %v851 = vunpack.c.l.b16 %v514
    %v852 = vpack.c.b16 %v663, %v660
    %v853 = vpack.c.b16 %v664, %v661
    %v854 = vpack.c.b16 %v665, %v662
    %v855 = vpack.c.b16 %v669, %v666
    %v856 = vpack.c.b16 %v670, %v667
    %v857 = vpack.c.b16 %v671, %v668
    %v858 = vpack.c.b16 %v675, %v672
    %v859 = vpack.c.b16 %v676, %v673
    %v860 = vpack.c.b16 %v677, %v674
    %v861 = vpack.c.b16 %v681, %v678
    %v862 = vpack.c.b16 %v682, %v679
    %v863 = vpack.c.b16 %v683, %v680
    %v864 = vpack.c.b16 %v687, %v684
    %v865 = vpack.c.b16 %v688, %v685
    %v866 = vpack.c.b16 %v689, %v686
    %v867 = vpack.c.b16 %v693, %v690
    %v868 = vpack.c.b16 %v694, %v691
    %v869 = vpack.c.b16 %v695, %v692
    %v870 = vpack.c.b16 %v699, %v696
    %v871 = vpack.c.b16 %v700, %v697
    %v872 = vpack.c.b16 %v701, %v698
    %v873 = vpack.c.b16 %v705, %v702
    %v874 = vpack.c.b16 %v706, %v703
    %v875 = vpack.c.b16 %v707, %v704
    %v876 = vpack.c.b16 %v711, %v708
    %v877 = vpack.c.b16 %v712, %v709
    %v878 = vpack.c.b16 %v713, %v710
    %v879 = vpack.c.b16 %v717, %v714
    %v880 = vpack.c.b16 %v718, %v715
    %v881 = vpack.c.b16 %v719, %v716
    %v882 = vpack.c.b16 %v723, %v720
    %v883 = vpack.c.b16 %v724, %v721
    %v884 = vpack.c.b16 %v725, %v722
    %v885 = vpack.c.b16 %v729, %v726
    %v886 = vpack.c.b16 %v730, %v727
    %v887 = vpack.c.b16 %v731, %v728
    %v888 = vpack.c.b16 %v735, %v732
    %v889 = vpack.c.b16 %v736, %v733
    %v890 = vpack.c.b16 %v737, %v734
    %v891 = vpack.c.b16 %v741, %v738
    %v892 = vpack.c.b16 %v742, %v739
    %v893 = vpack.c.b16 %v743, %v740
    %v894 = vpack.c.b16 %v747, %v744
    %v895 = vpack.c.b16 %v748, %v745
    %v896 = vpack.c.b16 %v749, %v746
    %v897 = vpack.c.b16 %v753, %v750
    %v898 = vpack.c.b16 %v754, %v751
    %v899 = vpack.c.b16 %v755, %v752
    %v900 = vpack.c.b16 %v759, %v756
    %v901 = vpack.c.b16 %v760, %v757
    %v902 = vpack.c.b16 %v761, %v758
    %v903 = vpack.c.b16 %v765, %v762
    %v904 = vpack.c.b16 %v766, %v763
    %v905 = vpack.c.b16 %v767, %v764
    %v906 = vpack.c.b16 %v771, %v768
    %v907 = vpack.c.b16 %v772, %v769
    %v908 = vpack.c.b16 %v773, %v770
    %v909 = vpack.c.b16 %v777, %v774
    %v910 = vpack.c.b16 %v778, %v775
    %v911 = vpack.c.b16 %v779, %v776
    %v912 = vpack.c.b16 %v783, %v780
    %v913 = vpack.c.b16 %v784, %v781
    %v914 = vpack.c.b16 %v785, %v782
    %v915 = vpack.c.b16 %v789, %v786
    %v916 = vpack.c.b16 %v790, %v787
    %v917 = vpack.c.b16 %v791, %v788
    %v918 = vpack.c.b16 %v795, %v792
    %v919 = vpack.c.b16 %v796, %v793
    %v920 = vpack.c.b16 %v797, %v794
    %v921 = vpack.c.b16 %v801, %v798
    %v922 = vpack.c.b16 %v802, %v799
    %v923 = vpack.c.b16 %v803, %v800
    %v924 = vpack.c.b16 %v807, %v804
    %v925 = vpack.c.b16 %v808, %v805
    %v926 = vpack.c.b16 %v809, %v806
    %v927 = vpack.c.b16 %v813, %v810
    %v928 = vpack.c.b16 %v814, %v811
    %v929 = vpack.c.b16 %v815, %v812
    %v930 = vpack.c.b16 %v819, %v816
    %v931 = vpack.c.b16 %v820, %v817
    %v932 = vpack.c.b16 %v821, %v818
    %v933 = vpack.c.b16 %v825, %v822
    %v934 = vpack.c.b16 %v826, %v823
    %v935 = vpack.c.b16 %v827, %v824
    %v936 = vpack.c.b16 %v831, %v828
    %v937 = vpack.c.b16 %v832, %v829
    %v938 = vpack.c.b16 %v833, %v830
    %v939 = vpack.c.b16 %v837, %v834
    %v940 = vpack.c.b16 %v838, %v835
    %v941 = vpack.c.b16 %v839, %v836
    %v942 = vpack.c.b16 %v843, %v840
    %v943 = vpack.c.b16 %v844, %v841
    %v944 = vpack.c.b16 %v845, %v842
    %v945 = vpack.c.b16 %v849, %v846
    %v946 = vpack.c.b16 %v850, %v847
    %v947 = vpack.c.b16 %v851, %v848
    %1044 = vmatprep.subr.bf16.mxu0 %v853
    %1045 = vmatpush1.bf16.msra.mxu0 %v852
    %1046 = vmatprep.subr.bf16.mxu0 %v856
    %1047 = vmatpush1.bf16.msra.mxu0 %v855
    %1048 = vmatprep.subr.bf16.mxu0 %v859
    %1049 = vmatpush1.bf16.msra.mxu0 %v858
    %1050 = vmatprep.subr.bf16.mxu0 %v862
    %1051 = vmatpush1.bf16.msra.mxu0 %v861
    %1052 = vmatprep.subr.bf16.mxu0 %v865
    %1053 = vmatpush1.bf16.msra.mxu0 %v864
    %1054 = vmatprep.subr.bf16.mxu0 %v868
    %1055 = vmatpush1.bf16.msra.mxu0 %v867
    %1056 = vmatprep.subr.bf16.mxu0 %v871
    %1057 = vmatpush1.bf16.msra.mxu0 %v870
    %1058 = vmatprep.subr.bf16.mxu0 %v874
    %1059 = vmatpush1.bf16.msra.mxu0 %v873
    %1060 = vmatprep.subr.bf16.mxu0 %v877
    %1061 = vmatpush1.bf16.msra.mxu0 %v876
    %1062 = vmatprep.subr.bf16.mxu0 %v880
    %1063 = vmatpush1.bf16.msra.mxu0 %v879
    %1064 = vmatprep.subr.bf16.mxu0 %v883
    %1065 = vmatpush1.bf16.msra.mxu0 %v882
    %1066 = vmatprep.subr.bf16.mxu0 %v886
    %1067 = vmatpush1.bf16.msra.mxu0 %v885
    %1068 = vmatprep.subr.bf16.mxu0 %v889
    %1069 = vmatpush1.bf16.msra.mxu0 %v888
    %1070 = vmatprep.subr.bf16.mxu0 %v892
    %1071 = vmatpush1.bf16.msra.mxu0 %v891
    %1072 = vmatprep.subr.bf16.mxu0 %v895
    %1073 = vmatpush1.bf16.msra.mxu0 %v894
    %1074 = vmatprep.subr.bf16.mxu0 %v898
    %1075 = vmatpush1.bf16.msra.mxu0 %v897
    %1076 = vmatprep.mubr.bf16.mxu0 %v384
    %1077 = vmatmul.mubr.bf16.gmra.mrb[0].mxu0 %v383
    %v1078 = vpop.f32.mrb[0].mxu0
    %v1079 = vadd.f32 %v520, %v1078
    %v1080 = vpop.f32.mrb[0].mxu0
    %v1081 = vadd.f32 %v524, %v1080
    %v1082 = vpop.f32.mrb[0].mxu0
    %v1083 = vpop.f32.mrb[0].mxu0
    %1084 = vdwg.mxu0
    %1085 = vmatprep.subr.bf16.mxu0 %v901
    %1086 = vmatpush1.bf16.msra.mxu0 %v900
    %1087 = vmatprep.subr.bf16.mxu0 %v904
    %1088 = vmatpush1.bf16.msra.mxu0 %v903
    %1089 = vmatprep.subr.bf16.mxu0 %v907
    %1090 = vmatpush1.bf16.msra.mxu0 %v906
    %1091 = vmatprep.subr.bf16.mxu0 %v910
    %1092 = vmatpush1.bf16.msra.mxu0 %v909
    %1093 = vmatprep.subr.bf16.mxu0 %v913
    %1094 = vmatpush1.bf16.msra.mxu0 %v912
    %1095 = vmatprep.subr.bf16.mxu0 %v916
    %1096 = vmatpush1.bf16.msra.mxu0 %v915
    %1097 = vmatprep.subr.bf16.mxu0 %v919
    %1098 = vmatpush1.bf16.msra.mxu0 %v918
    %1099 = vmatprep.subr.bf16.mxu0 %v922
    %1100 = vmatpush1.bf16.msra.mxu0 %v921
    %1101 = vmatprep.subr.bf16.mxu0 %v925
    %1102 = vmatpush1.bf16.msra.mxu0 %v924
    %1103 = vmatprep.subr.bf16.mxu0 %v928
    %1104 = vmatpush1.bf16.msra.mxu0 %v927
    %1105 = vmatprep.subr.bf16.mxu0 %v931
    %1106 = vmatpush1.bf16.msra.mxu0 %v930
    %1107 = vmatprep.subr.bf16.mxu0 %v934
    %1108 = vmatpush1.bf16.msra.mxu0 %v933
    %1109 = vmatprep.subr.bf16.mxu0 %v937
    %1110 = vmatpush1.bf16.msra.mxu0 %v936
    %1111 = vmatprep.subr.bf16.mxu0 %v940
    %1112 = vmatpush1.bf16.msra.mxu0 %v939
    %1113 = vmatprep.subr.bf16.mxu0 %v943
    %1114 = vmatpush1.bf16.msra.mxu0 %v942
    %1115 = vmatprep.subr.bf16.mxu0 %v946
    %1116 = vmatpush1.bf16.msra.mxu0 %v945
    %1117 = vmatprep.mubr.bf16.mxu0 %v386
    %1118 = vmatmul.mubr.bf16.gmra.mrb[0].mxu0 %v385
    %v1119 = vpop.f32.mrb[0].mxu0
    %v1120 = vadd.f32 %v1079, %v1119
    %v1121 = vpop.f32.mrb[0].mxu0
    %v1122 = vadd.f32 %v1081, %v1121
    %v1123 = vpop.f32.mrb[0].mxu0
    %v1124 = vpop.f32.mrb[0].mxu0
    %1125 = vdwg.mxu0
    %1126 = vmatprep.subr.bf16.mxu0 0
    %1127 = vmatpush1.bf16.msra.mxu0 %v854
    %1128 = vmatprep.subr.bf16.mxu0 0
    %1129 = vmatpush1.bf16.msra.mxu0 %v857
    %1130 = vmatprep.subr.bf16.mxu0 0
    %1131 = vmatpush1.bf16.msra.mxu0 %v860
    %1132 = vmatprep.subr.bf16.mxu0 0
    %1133 = vmatpush1.bf16.msra.mxu0 %v863
    %1134 = vmatprep.subr.bf16.mxu0 0
    %1135 = vmatpush1.bf16.msra.mxu0 %v866
    %1136 = vmatprep.subr.bf16.mxu0 0
    %1137 = vmatpush1.bf16.msra.mxu0 %v869
    %1138 = vmatprep.subr.bf16.mxu0 0
    %1139 = vmatpush1.bf16.msra.mxu0 %v872
    %1140 = vmatprep.subr.bf16.mxu0 0
    %1141 = vmatpush1.bf16.msra.mxu0 %v875
    %1142 = vmatprep.subr.bf16.mxu0 0
    %1143 = vmatpush1.bf16.msra.mxu0 %v878
    %1144 = vmatprep.subr.bf16.mxu0 0
    %1145 = vmatpush1.bf16.msra.mxu0 %v881
    %1146 = vmatprep.subr.bf16.mxu0 0
    %1147 = vmatpush1.bf16.msra.mxu0 %v884
    %1148 = vmatprep.subr.bf16.mxu0 0
    %1149 = vmatpush1.bf16.msra.mxu0 %v887
    %1150 = vmatprep.subr.bf16.mxu0 0
    %1151 = vmatpush1.bf16.msra.mxu0 %v890
    %1152 = vmatprep.subr.bf16.mxu0 0
    %1153 = vmatpush1.bf16.msra.mxu0 %v893
    %1154 = vmatprep.subr.bf16.mxu0 0
    %1155 = vmatpush1.bf16.msra.mxu0 %v896
    %1156 = vmatprep.subr.bf16.mxu0 0
    %1157 = vmatpush1.bf16.msra.mxu0 %v899
    %1158 = vmatprep.mubr.bf16.mxu0 %v384
    %1159 = vmatmul.mubr.bf16.gmra.mrb[0].mxu0 %v383
    %v1160 = vpop.f32.mrb[0].mxu0
    %v1161 = vadd.f32 %v528, %v1160
    %v1162 = vpop.f32.mrb[0].mxu0
    %v1163 = vpop.f32.mrb[0].mxu0
    %v1164 = vpop.f32.mrb[0].mxu0
    %1165 = vdwg.mxu0
    %1166 = vmatprep.subr.bf16.mxu0 0
    %1167 = vmatpush1.bf16.msra.mxu0 %v902
    %1168 = vmatprep.subr.bf16.mxu0 0
    %1169 = vmatpush1.bf16.msra.mxu0 %v905
    %1170 = vmatprep.subr.bf16.mxu0 0
    %1171 = vmatpush1.bf16.msra.mxu0 %v908
    %1172 = vmatprep.subr.bf16.mxu0 0
    %1173 = vmatpush1.bf16.msra.mxu0 %v911
    %1174 = vmatprep.subr.bf16.mxu0 0
    %1175 = vmatpush1.bf16.msra.mxu0 %v914
    %1176 = vmatprep.subr.bf16.mxu0 0
    %1177 = vmatpush1.bf16.msra.mxu0 %v917
    %1178 = vmatprep.subr.bf16.mxu0 0
    %1179 = vmatpush1.bf16.msra.mxu0 %v920
    %1180 = vmatprep.subr.bf16.mxu0 0
    %1181 = vmatpush1.bf16.msra.mxu0 %v923
    %1182 = vmatprep.subr.bf16.mxu0 0
    %1183 = vmatpush1.bf16.msra.mxu0 %v926
    %1184 = vmatprep.subr.bf16.mxu0 0
    %1185 = vmatpush1.bf16.msra.mxu0 %v929
    %1186 = vmatprep.subr.bf16.mxu0 0
    %1187 = vmatpush1.bf16.msra.mxu0 %v932
    %1188 = vmatprep.subr.bf16.mxu0 0
    %1189 = vmatpush1.bf16.msra.mxu0 %v935
    %1190 = vmatprep.subr.bf16.mxu0 0
    %1191 = vmatpush1.bf16.msra.mxu0 %v938
    %1192 = vmatprep.subr.bf16.mxu0 0
    %1193 = vmatpush1.bf16.msra.mxu0 %v941
    %1194 = vmatprep.subr.bf16.mxu0 0
    %1195 = vmatpush1.bf16.msra.mxu0 %v944
    %1196 = vmatprep.subr.bf16.mxu0 0
    %1197 = vmatpush1.bf16.msra.mxu0 %v947
    %1198 = vmatprep.mubr.bf16.mxu0 %v386
    %1199 = vmatmul.mubr.bf16.gmra.mrb[0].mxu0 %v385
    %v1200 = vpop.f32.mrb[0].mxu0
    %v1201 = vadd.f32 %v1161, %v1200
    %v1202 = vpop.f32.mrb[0].mxu0
    %v1203 = vpop.f32.mrb[0].mxu0
    %v1204 = vpop.f32.mrb[0].mxu0
    %1205 = vdwg.mxu0
    %v1206 = vmax.f32 %v1120, 0.0
    %v1207 = vmax.f32 %v1122, 0.0
    %v1208 = vmax.f32 %v1201, 0.0
    %v1209 = vpack.c.bf16 %v1206, %v1206
    %v1210 = vpack.c.bf16 %v1207, %v1207
    %v1211 = vpack.c.bf16 %v1208, %v1208
    %v1212 = vld [vmem:[#allocation8] sm:$0xf]
    %v1213 = vld [vmem:[#allocation8 + $0x4] sm:$0xf]
    %v1214 = vld [vmem:[#allocation8 + $0x8] sm:$0xf]
    %v1215 = vld [vmem:[#allocation8 + $0xc] sm:$0xf]
    %v1216 = vld [vmem:[#allocation8 + $0x10] sm:$0xf]
    %v1217 = vld [vmem:[#allocation8 + $0x14] sm:$0xf]
    %v1218 = vld [vmem:[#allocation8 + $0x18] sm:$0xf]
    %v1219 = vld [vmem:[#allocation8 + $0x1c] sm:$0xf]
    %v1220 = vld [vmem:[#allocation8 + $0x20] sm:$0xf]
    %v1221 = vld [vmem:[#allocation8 + $0x24] sm:$0xf]
    %v1222 = vld [vmem:[#allocation8 + $0x28] sm:$0xf]
    %v1223 = vld [vmem:[#allocation8 + $0x2c] sm:$0xf]
    %v1224 = vld [vmem:[#allocation8 + $0x30] sm:$0xf]
    %v1225 = vld [vmem:[#allocation8 + $0x34] sm:$0xf]
    %v1226 = vld [vmem:[#allocation8 + $0x38] sm:$0xf]
    %v1227 = vld [vmem:[#allocation8 + $0x3c] sm:$0xf]
    %v1228 = vld [vmem:[#allocation8 + $0x40] sm:$0xf]
    %v1229 = vld [vmem:[#allocation8 + $0x44] sm:$0xf]
    %v1230 = vld [vmem:[#allocation8 + $0x48] sm:$0xf]
    %v1231 = vld [vmem:[#allocation8 + $0x4c] sm:$0xf]
    %v1232 = vld [vmem:[#allocation8 + $0x50] sm:$0xf]
    %v1233 = vld [vmem:[#allocation8 + $0x54] sm:$0xf]
    %v1234 = vld [vmem:[#allocation8 + $0x58] sm:$0xf]
    %v1235 = vld [vmem:[#allocation8 + $0x5c] sm:$0xf]
    %v1236 = vld [vmem:[#allocation8 + $0x60] sm:$0xf]
    %v1237 = vld [vmem:[#allocation8 + $0x64] sm:$0xf]
    %v1238 = vld [vmem:[#allocation8 + $0x68] sm:$0xf]
    %v1239 = vld [vmem:[#allocation8 + $0x6c] sm:$0xf]
    %v1240 = vld [vmem:[#allocation8 + $0x70] sm:$0xf]
    %v1241 = vld [vmem:[#allocation8 + $0x74] sm:$0xf]
    %v1242 = vld [vmem:[#allocation8 + $0x78] sm:$0xf]
    %v1243 = vld [vmem:[#allocation8 + $0x7c] sm:$0xf]
    %v1244 = vld [vmem:[#allocation8 + $0x80] sm:$0xf]
    %v1245 = vld [vmem:[#allocation8 + $0x84] sm:$0xf]
    %v1246 = vld [vmem:[#allocation8 + $0x88] sm:$0xf]
    %v1247 = vld [vmem:[#allocation8 + $0x8c] sm:$0xf]
    %v1248 = vld [vmem:[#allocation8 + $0x90] sm:$0xf]
    %v1249 = vld [vmem:[#allocation8 + $0x94] sm:$0xf]
    %v1250 = vld [vmem:[#allocation8 + $0x98] sm:$0xf]
    %v1251 = vld [vmem:[#allocation8 + $0x9c] sm:$0xf]
    %v1252 = vld [vmem:[#allocation8 + $0xa0] sm:$0xf]
    %v1253 = vld [vmem:[#allocation8 + $0xa4] sm:$0xf]
    %v1254 = vld [vmem:[#allocation8 + $0xa8] sm:$0xf]
    %v1255 = vld [vmem:[#allocation8 + $0xac] sm:$0xf]
    %v1256 = vld [vmem:[#allocation8 + $0xb0] sm:$0xf]
    %v1257 = vld [vmem:[#allocation8 + $0xb4] sm:$0xf]
    %v1258 = vld [vmem:[#allocation8 + $0xb8] sm:$0xf]
    %v1259 = vld [vmem:[#allocation8 + $0xbc] sm:$0xf]
    %v1260 = vld [vmem:[%s6] sm:$0x1]
    %v1262 = vlaneseq
    %v1263 = vshrl.u32 %v1262, 7
    %v1264 = vsub.s32 0, %v1263
    %v1265 = vrot.slane %v1260, %v1264
    %v1315 = vunpack.c.l.b16 %v1212
    %v1316 = vunpack.c.l.b16 %v1213
    %v1317 = vunpack.c.l.b16 %v1214
    %v1318 = vunpack.c.l.b16 %v1215
    %v1319 = vunpack.c.l.b16 %v1216
    %v1320 = vunpack.c.l.b16 %v1217
    %v1321 = vunpack.c.l.b16 %v1218
    %v1322 = vunpack.c.l.b16 %v1219
    %v1323 = vunpack.c.l.b16 %v1220
    %v1324 = vunpack.c.l.b16 %v1221
    %v1325 = vunpack.c.l.b16 %v1222
    %v1326 = vunpack.c.l.b16 %v1223
    %v1327 = vunpack.c.l.b16 %v1224
    %v1328 = vunpack.c.l.b16 %v1225
    %v1329 = vunpack.c.l.b16 %v1226
    %v1330 = vunpack.c.l.b16 %v1227
    %v1331 = vunpack.c.l.b16 %v1228
    %v1332 = vunpack.c.l.b16 %v1229
    %v1333 = vunpack.c.l.b16 %v1230
    %v1334 = vunpack.c.l.b16 %v1231
    %v1335 = vunpack.c.l.b16 %v1232
    %v1336 = vunpack.c.l.b16 %v1233
    %v1337 = vunpack.c.l.b16 %v1234
    %v1338 = vunpack.c.l.b16 %v1235
    %v1339 = vunpack.c.l.b16 %v1236
    %v1340 = vunpack.c.l.b16 %v1237
    %v1341 = vunpack.c.l.b16 %v1238
    %v1342 = vunpack.c.l.b16 %v1239
    %v1343 = vunpack.c.l.b16 %v1240
    %v1344 = vunpack.c.l.b16 %v1241
    %v1345 = vunpack.c.l.b16 %v1242
    %v1346 = vunpack.c.l.b16 %v1243
    %v1347 = vunpack.c.l.b16 %v1244
    %v1348 = vunpack.c.l.b16 %v1245
    %v1349 = vunpack.c.l.b16 %v1246
    %v1350 = vunpack.c.l.b16 %v1247
    %v1351 = vunpack.c.l.b16 %v1248
    %v1352 = vunpack.c.l.b16 %v1249
    %v1353 = vunpack.c.l.b16 %v1250
    %v1354 = vunpack.c.l.b16 %v1251
    %v1355 = vunpack.c.l.b16 %v1252
    %v1356 = vunpack.c.l.b16 %v1253
    %v1357 = vunpack.c.l.b16 %v1254
    %v1358 = vunpack.c.l.b16 %v1255
    %v1359 = vunpack.c.l.b16 %v1256
    %v1360 = vunpack.c.l.b16 %v1257
    %v1361 = vunpack.c.l.b16 %v1258
    %v1362 = vunpack.c.l.b16 %v1259
    %v1363 = vpack.c.b16 %v1316, %v1315
    %v1364 = vpack.c.b16 %v1318, %v1317
    %v1365 = vpack.c.b16 %v1320, %v1319
    %v1366 = vpack.c.b16 %v1322, %v1321
    %v1367 = vpack.c.b16 %v1324, %v1323
    %v1368 = vpack.c.b16 %v1326, %v1325
    %v1369 = vpack.c.b16 %v1328, %v1327
    %v1370 = vpack.c.b16 %v1330, %v1329
    %v1371 = vpack.c.b16 %v1332, %v1331
    %v1372 = vpack.c.b16 %v1334, %v1333
    %v1373 = vpack.c.b16 %v1336, %v1335
    %v1374 = vpack.c.b16 %v1338, %v1337
    %v1375 = vpack.c.b16 %v1340, %v1339
    %v1376 = vpack.c.b16 %v1342, %v1341
    %v1377 = vpack.c.b16 %v1344, %v1343
    %v1378 = vpack.c.b16 %v1346, %v1345
    %v1379 = vpack.c.b16 %v1348, %v1347
    %v1380 = vpack.c.b16 %v1350, %v1349
    %v1381 = vpack.c.b16 %v1352, %v1351
    %v1382 = vpack.c.b16 %v1354, %v1353
    %v1383 = vpack.c.b16 %v1356, %v1355
    %v1384 = vpack.c.b16 %v1358, %v1357
    %v1385 = vpack.c.b16 %v1360, %v1359
    %v1386 = vpack.c.b16 %v1362, %v1361
    %1411 = vmatprep.subr.bf16.mxu0 0
    %1412 = vmatpush1.bf16.msra.mxu0 %v1363
    %1413 = vmatprep.subr.bf16.mxu0 0
    %1414 = vmatpush1.bf16.msra.mxu0 %v1364
    %1415 = vmatprep.subr.bf16.mxu0 0
    %1416 = vmatpush1.bf16.msra.mxu0 %v1365
    %1417 = vmatprep.subr.bf16.mxu0 0
    %1418 = vmatpush1.bf16.msra.mxu0 %v1366
    %1419 = vmatprep.subr.bf16.mxu0 0
    %1420 = vmatpush1.bf16.msra.mxu0 %v1367
    %1421 = vmatprep.subr.bf16.mxu0 0
    %1422 = vmatpush1.bf16.msra.mxu0 %v1368
    %1423 = vmatprep.subr.bf16.mxu0 0
    %1424 = vmatpush1.bf16.msra.mxu0 %v1369
    %1425 = vmatprep.subr.bf16.mxu0 0
    %1426 = vmatpush1.bf16.msra.mxu0 %v1370
    %1427 = vmatprep.subr.bf16.mxu0 0
    %1428 = vmatpush1.bf16.msra.mxu0 %v1371
    %1429 = vmatprep.subr.bf16.mxu0 0
    %1430 = vmatpush1.bf16.msra.mxu0 %v1372
    %1431 = vmatprep.subr.bf16.mxu0 0
    %1432 = vmatpush1.bf16.msra.mxu0 %v1373
    %1433 = vmatprep.subr.bf16.mxu0 0
    %1434 = vmatpush1.bf16.msra.mxu0 %v1374
    %1435 = vmatprep.subr.bf16.mxu0 0
    %1436 = vmatpush1.bf16.msra.mxu0 %v1375
    %1437 = vmatprep.subr.bf16.mxu0 0
    %1438 = vmatpush1.bf16.msra.mxu0 %v1376
    %1439 = vmatprep.subr.bf16.mxu0 0
    %1440 = vmatpush1.bf16.msra.mxu0 %v1377
    %1441 = vmatprep.subr.bf16.mxu0 0
    %1442 = vmatpush1.bf16.msra.mxu0 %v1378
    %1443 = vmatprep.mubr.bf16.mxu0 %v1210
    %1444 = vmatmul.mubr.bf16.gmra.mrb[0].mxu0 %v1209
    %v1445 = vpop.f32.mrb[0].mxu0
    %v1446 = vadd.f32 %v1265, %v1445
    %v1447 = vpop.f32.mrb[0].mxu0
    %v1448 = vpop.f32.mrb[0].mxu0
    %v1449 = vpop.f32.mrb[0].mxu0
    %1450 = vdwg.mxu0
    %1451 = vmatprep.subr.bf16.mxu0 0
    %1452 = vmatpush1.bf16.msra.mxu0 %v1379
    %1453 = vmatprep.subr.bf16.mxu0 0
    %1454 = vmatpush1.bf16.msra.mxu0 %v1380
    %1455 = vmatprep.subr.bf16.mxu0 0
    %1456 = vmatpush1.bf16.msra.mxu0 %v1381
    %1457 = vmatprep.subr.bf16.mxu0 0
    %1458 = vmatpush1.bf16.msra.mxu0 %v1382
    %1459 = vmatprep.subr.bf16.mxu0 0
    %1460 = vmatpush1.bf16.msra.mxu0 %v1383
    %1461 = vmatprep.subr.bf16.mxu0 0
    %1462 = vmatpush1.bf16.msra.mxu0 %v1384
    %1463 = vmatprep.subr.bf16.mxu0 0
    %1464 = vmatpush1.bf16.msra.mxu0 %v1385
    %1465 = vmatprep.subr.bf16.mxu0 0
    %1466 = vmatpush1.bf16.msra.mxu0 %v1386
    %1467 = vmatprep.subr.bf16.mxu0 0
    %1468 = vmatpush1.bf16.msra.mxu0 0
    %1469 = vmatprep.subr.bf16.mxu0 0
    %1470 = vmatpush1.bf16.msra.mxu0 0
    %1471 = vmatprep.subr.bf16.mxu0 0
    %1472 = vmatpush1.bf16.msra.mxu0 0
    %1473 = vmatprep.subr.bf16.mxu0 0
    %1474 = vmatpush1.bf16.msra.mxu0 0
    %1475 = vmatprep.subr.bf16.mxu0 0
    %1476 = vmatpush1.bf16.msra.mxu0 0
    %1477 = vmatprep.subr.bf16.mxu0 0
    %1478 = vmatpush1.bf16.msra.mxu0 0
    %1479 = vmatprep.subr.bf16.mxu0 0
    %1480 = vmatpush1.bf16.msra.mxu0 0
    %1481 = vmatprep.subr.bf16.mxu0 0
    %1482 = vmatpush1.bf16.msra.mxu0 0
    %1483 = vmatprep.mubr.bf16.mxu0 0
    %1484 = vmatmul.mubr.bf16.gmra.mrb[0].mxu0 %v1211
    %v1485 = vpop.f32.mrb[0].mxu0
    %v1486 = vadd.f32 %v1446, %v1485
    %v1487 = vpop.f32.mrb[0].mxu0
    %v1488 = vpop.f32.mrb[0].mxu0
    %v1489 = vpop.f32.mrb[0].mxu0
    %1490 = vdwg.mxu0
    %v1491 = vtanh.pop %v1486
    %1492 = vst [vmem:[#allocation10] sm:$0xff] %v1491
    // Predicated region
    $region46: #{tpu_custom_call.1} parent=1 // pred_check
      _
    $region47: #{tpu_custom_call.1} parent=1 // pred_check_branch
      %1494 = sbr.rel (0) target = $region49
    $region48: #{tpu_custom_call.1} parent=1 // pred_region
      %s1496 = ssub.s32 128, 128
      %1497 = vsyncadd [#allocation4], %s1496
      %s1499 = sshll.u32 [#allocation10], 4
      %s1500 = int_to_ptr.vmem [resolvable:$true] %s1499
      %1502 = dma.vmem_to_hbm [thread:$0]  %s1500, 128, %s7, [#allocation4]
    $region49: #{tpu_custom_call.1} parent=1 // pred_fallthru
      _
    // Predicated region
    $region50: #{tpu_custom_call.1} parent=1 // pred_check
      _
    $region51: #{tpu_custom_call.1} parent=1 // pred_check_branch
      %1504 = sbr.rel (0) target = $region53
    $region52: #{tpu_custom_call.1} parent=1 // pred_region
      %1505 = dma.done [#allocation4], 128
    $region53: #{tpu_custom_call.1} parent=1 // pred_fallthru
      _
    %1506 = vsyncpa [#allocation3], 1
    %1507 = vsyncpa [#allocation6], 1
    %1508 = vsyncpa [#allocation9], 1
    %1509 = vsyncpa [#allocation4], 1

</llo_original>
